<compile_context>
chip_gen: v7x
topology: tpu7x:2x2x1
jax: 0.10.0
libtpu: 0.0.40
codegen_flags: <defaults>
</compile_context>

<pallas_src>
import functools

import jax
import jax.numpy as jnp
from jax.experimental import pallas as pl
from jax.experimental.pallas import tpu as pltpu

_TB_MAX = 256    # max batch-tile rows
_TS_MAX = 2048   # max seq-tile lanes
_LANES = 128
_SUBLANES = 32   # sublane multiple safe for mixed f32 / bf16 / int8 streams


def _round_down(x, m):
    return (x // m) * m


def _lane_sums(x):
    """Reduce (tb, ts) f32 -> (tb, 128) partial sums, lane-dense.

    For ts a multiple of 128 this is a chain of plain VPU adds on 128-lane
    aligned slices (no XLU cross-lane reduce, no relayout).  For tiny
    full-extent tiles (ts < 128) fall back to one cross-lane reduce into lane 0.
    """
    tb, ts = x.shape
    if ts % _LANES == 0:
        acc = x[:, :_LANES]
        for c in range(1, ts // _LANES):
            acc = acc + x[:, c * _LANES:(c + 1) * _LANES]
        return acc
    s = jnp.sum(x, axis=-1, keepdims=True)                       # (tb, 1)
    lane = jax.lax.broadcasted_iota(jnp.int32, (tb, _LANES), 1)
    return jnp.where(lane == 0, s, 0.0)                          # (tb, 128)


def _policy_loss_kernel(*refs, clip_eps, seq_len, seq_tile_len, ns_inner,
                        ns_total, n_split, has_mask):
    if has_mask:
        logp_ref, old_ref, adv_ref, mask_ref, num_ref, den_ref = refs
    else:
        logp_ref, old_ref, adv_ref, num_ref = refs
        mask_ref = den_ref = None

    js = pl.program_id(2)          # seq (reduction) axis -- last in the grid
    seq_tile = pl.program_id(0) * ns_inner + js   # global seq-tile index

    @pl.when(js == 0)
    def _():
        num_ref[...] = jnp.zeros_like(num_ref)
        if has_mask:
            den_ref[...] = jnp.zeros_like(den_ref)

    def accumulate():
        # Upcast in-register; inputs may be bf16 (half the HBM read traffic).
        logp = logp_ref[...].astype(jnp.float32)
        old = old_ref[...].astype(jnp.float32)
        adv = adv_ref[...].astype(jnp.float32)

        ratio = jnp.exp(logp - old)
        surr1 = ratio * adv
        surr2 = jnp.clip(ratio, 1.0 - clip_eps, 1.0 + clip_eps * 1.3) * adv
        loss = -jnp.minimum(surr1, surr2)

        if has_mask:
            mask = mask_ref[...].astype(jnp.float32)
            num_c = loss * mask
            den_c = mask
        else:
            num_c = loss
            den_c = None

        if seq_len % seq_tile_len != 0:
            # Ragged seq tail: out-of-bounds block contents are undefined, so
            # select with where (0 * NaN/inf must not leak into the row sums).
            tb, ts = num_c.shape
            col = (jax.lax.broadcasted_iota(jnp.int32, (tb, ts), 1)
                   + seq_tile * seq_tile_len)
            valid = col < seq_len
            num_c = jnp.where(valid, num_c, 0.0)
            if has_mask:
                den_c = jnp.where(valid, den_c, 0.0)

        num_ref[...] += _lane_sums(num_c)[None]
        if has_mask:
            den_ref[...] += _lane_sums(den_c)[None]

    if n_split * ns_inner > ns_total:
        # Odd seq-tile count split across 2 halves: the extra (clamped) tile
        # must not contribute.
        pl.when(seq_tile < ns_total)(accumulate)
    else:
        accumulate()


def policy_loss(log_probs, old_log_probs, advantages, action_mask=None,
                clip_eps: float = 0.2):
    """PPO clipped policy loss over (B, S) inputs; returns a scalar float32."""
    log_probs = jnp.asarray(log_probs)
    old_log_probs = jnp.asarray(old_log_probs)
    advantages = jnp.asarray(advantages)
    B, S = log_probs.shape
    has_mask = action_mask is not None

    # ---- tile selection (no host-side padding) ------------------------------
    if B <= _SUBLANES:
        tb = B                                   # full-extent block: always legal
    else:
        # multiple of 32 (safe sublane multiple for f32/bf16/int8 streams),
        # aimed at >= 2 batch tiles so v7x's second TensorCore has work.
        tb = min(_TB_MAX, max(_SUBLANES, _round_down(B // 2, _SUBLANES)))
    if S < _LANES:
        ts = S                                   # full-extent block: always legal
    else:
        ts = min(_TS_MAX, _round_down(S, _LANES))

    n_b = pl.cdiv(B, tb)
    ns_total = pl.cdiv(S, ts)
    # If the batch axis has a single tile, split the sequence reduction into two
    # parallel halves (each with its own partial accumulator) for v7x megacore.
    n_split = 2 if (n_b == 1 and ns_total >= 2) else 1
    ns_inner = pl.cdiv(ns_total, n_split)

    grid = (n_split, n_b, ns_inner)

    def in_map(h, ib, js):
        # Clamp keeps a fully-out-of-range tile (odd split) in bounds; its
        # contribution is skipped in-kernel via pl.when.
        return (ib, jnp.minimum(h * ns_inner + js, ns_total - 1))

    in_spec = pl.BlockSpec((tb, ts), in_map)
    out_spec = pl.BlockSpec((1, tb, _LANES), lambda h, ib, js: (h, ib, 0))
    out_shape = jax.ShapeDtypeStruct((n_split, B, _LANES), jnp.float32)

    # ---- VMEM budget & cost estimate ----------------------------------------
    in_itemsize = sum(jnp.dtype(a.dtype).itemsize
                      for a in (log_probs, old_log_probs, advantages))
    if has_mask:
        in_itemsize += 1                          # int8 mask stream
    tile_in_bytes = tb * ts * in_itemsize
    out_tile_bytes = tb * _LANES * 4 * (2 if has_mask else 1)
    vmem_limit = int(2 * (tile_in_bytes + out_tile_bytes) + (8 << 20))
    vmem_limit = max(vmem_limit, 16 << 20)        # floor; worst case ~22 MiB

    cparams = pltpu.CompilerParams(
        dimension_semantics=("parallel", "parallel", "arbitrary"),
        vmem_limit_bytes=vmem_limit)
    cost = pl.CostEstimate(
        flops=8 * B * S,
        transcendentals=B * S,
        bytes_accessed=int(B * S * in_itemsize
                           + n_split * B * _LANES * 4 * (2 if has_mask else 1)))

    kernel = functools.partial(
        _policy_loss_kernel, clip_eps=float(clip_eps), seq_len=S,
        seq_tile_len=ts, ns_inner=ns_inner, ns_total=ns_total,
        n_split=n_split, has_mask=has_mask)

    if has_mask:
        action_mask = jnp.asarray(action_mask)
        if action_mask.dtype == jnp.bool_:
            action_mask = action_mask.astype(jnp.int8)   # 1 byte/elem in HBM
        num, den = pl.pallas_call(
            kernel,
            out_shape=(out_shape, out_shape),
            grid=grid,
            in_specs=[in_spec, in_spec, in_spec, in_spec],
            out_specs=(out_spec, out_spec),
            compiler_params=cparams,
            cost_estimate=cost,
        )(log_probs, old_log_probs, advantages, action_mask)
        per_seq = num.sum(axis=(0, 2)) / den.sum(axis=(0, 2))
    else:
        num = pl.pallas_call(
            kernel,
            out_shape=out_shape,
            grid=grid,
            in_specs=[in_spec, in_spec, in_spec],
            out_specs=out_spec,
            compiler_params=cparams,
            cost_estimate=cost,
        )(log_probs, old_log_probs, advantages)
        per_seq = num.sum(axis=(0, 2)) / jnp.float32(S)

    return jnp.mean(per_seq)


def _reference(log_probs, old_log_probs, advantages, action_mask,
               clip_eps=0.2):
    log_probs = jnp.asarray(log_probs).astype(jnp.float32)
    old_log_probs = jnp.asarray(old_log_probs).astype(jnp.float32)
    advantages = jnp.asarray(advantages).astype(jnp.float32)
    ratio = jnp.exp(log_probs - old_log_probs)
    surr1 = ratio * advantages
    surr2 = jnp.clip(ratio, 1 - clip_eps, 1 + clip_eps * 1.3) * advantages
    loss = -jnp.minimum(surr1, surr2)
    if action_mask is None:
        per = jnp.mean(loss, axis=-1)
    else:
        m = jnp.asarray(action_mask).astype(jnp.float32)
        per = jnp.sum(loss * m, axis=-1) / jnp.sum(m, axis=-1)
    return jnp.mean(per)


if __name__ == "__main__":
    def make(seed, B, S, dtype=jnp.float32):
        k1, k2, k3, k4 = jax.random.split(jax.random.PRNGKey(seed), 4)
        lp = jax.random.normal(k1, (B, S), jnp.float32) * 0.1 - 1.0
        olp = lp + jax.random.normal(k2, (B, S), jnp.float32) * 0.05
        adv = jax.random.normal(k3, (B, S), jnp.float32)
        am = jax.random.uniform(k4, (B, S)) > 0.3
        am = am.at[:, 0].set(True)            # >= 1 valid token per row
        return lp.astype(dtype), olp.astype(dtype), adv.astype(dtype), am

    # 1) small masked case (module-scale shapes): single tile, lane-0 reduce path
    lp, olp, adv, am = make(0, 2, 8)
    out = jax.block_until_ready(policy_loss(lp, olp, adv, am))
    ref = _reference(lp, olp, adv, am)
    assert jnp.allclose(out, ref, atol=1e-5, rtol=1e-5), ("case1", out, ref)

    # 2) maskless variant (skips the 4th input stream, divides by S)
    out = jax.block_until_ready(policy_loss(lp, olp, adv, None))
    ref = _reference(lp, olp, adv, None)
    assert jnp.allclose(out, ref, atol=1e-5, rtol=1e-5), ("case2", out, ref)

    # 3) small batch, long sequence: 2-way parallel seq split (odd tile count ->
    #    clamped index_map + pl.when guard) and ragged seq tail masking
    lp, olp, adv, am = make(1, 4, 4608)
    out = jax.block_until_ready(policy_loss(lp, olp, adv, am))
    ref = _reference(lp, olp, adv, am)
    assert jnp.allclose(out, ref, atol=1e-5, rtol=1e-5), ("case3", out, ref)

    # 4) B > 32, S not a multiple of 128: 2 batch tiles + ragged batch & seq tails
    lp, olp, adv, am = make(2, 48, 600)
    out = jax.block_until_ready(policy_loss(lp, olp, adv, am))
    ref = _reference(lp, olp, adv, am)
    assert jnp.allclose(out, ref, atol=1e-5, rtol=1e-5), ("case4", out, ref)

    # 5) bf16 activations streamed directly (upcast in-register inside the kernel)
    lp, olp, adv, am = make(3, 8, 256, dtype=jnp.bfloat16)
    out = jax.block_until_ready(policy_loss(lp, olp, adv, am))
    ref = _reference(lp, olp, adv, am)
    assert jnp.allclose(out, ref, atol=1e-4, rtol=1e-4), ("case5", out, ref)

    print("KERNEL_OK")
</pallas_src>

<mosaic_0001>
module attributes {stable_mosaic.version = 11 : i64} {
  func.func @_policy_loss_kernel(%arg0: i32, %arg1: i32, %arg2: i32, %arg3: memref<2x8xf32, #tpu.memory_space<vmem>>, %arg4: memref<2x8xf32, #tpu.memory_space<vmem>>, %arg5: memref<2x8xf32, #tpu.memory_space<vmem>>, %arg6: memref<2x8xi8, #tpu.memory_space<vmem>>, %arg7: memref<1x2x128xf32, #tpu.memory_space<vmem>>, %arg8: memref<1x2x128xf32, #tpu.memory_space<vmem>>) attributes {dimension_semantics = [#tpu.dimension_semantics<parallel>, #tpu.dimension_semantics<parallel>, #tpu.dimension_semantics<arbitrary>], iteration_bounds = array<i64: 1, 1, 1>, scalar_prefetch = 0 : i64, scratch_operands = 0 : i64, tpu.core_type = #tpu.core_type<tc>, window_params = [{transform_indices = @transform_0, window_bounds = array<i64: 2, 8>}, {transform_indices = @transform_1, window_bounds = array<i64: 2, 8>}, {transform_indices = @transform_2, window_bounds = array<i64: 2, 8>}, {transform_indices = @transform_3, window_bounds = array<i64: 2, 8>}, {transform_indices = @transform_4, window_bounds = array<i64: 1, 2, 128>}, {transform_indices = @transform_5, window_bounds = array<i64: 1, 2, 128>}]} {
    %c0_i32 = arith.constant 0 : i32
    %0 = arith.cmpi eq, %arg2, %c0_i32 : i32
    %1 = arith.extui %0 : i1 to i32
    %c0_i32_0 = arith.constant 0 : i32
    %2 = arith.cmpi ne, %1, %c0_i32_0 : i32
    scf.if %2 {
      %cst_28 = arith.constant 0.000000e+00 : f32
      %46 = vector.broadcast %cst_28 : f32 to vector<1x2x128xf32>
      %c0_29 = arith.constant 0 : index
      %c0_30 = arith.constant 0 : index
      %c0_31 = arith.constant 0 : index
      %47 = vector.load %arg7[%c0_29, %c0_30, %c0_31] : memref<1x2x128xf32, #tpu.memory_space<vmem>>, vector<1x2x128xf32>
      tpu.vector_store %arg7[%c0_29, %c0_30, %c0_31], %46 {strides = array<i32>} : memref<1x2x128xf32, #tpu.memory_space<vmem>>, vector<1x2x128xf32>,
      %cst_32 = arith.constant 0.000000e+00 : f32
      %48 = vector.broadcast %cst_32 : f32 to vector<1x2x128xf32>
      %c0_33 = arith.constant 0 : index
      %c0_34 = arith.constant 0 : index
      %c0_35 = arith.constant 0 : index
      %49 = vector.load %arg8[%c0_33, %c0_34, %c0_35] : memref<1x2x128xf32, #tpu.memory_space<vmem>>, vector<1x2x128xf32>
      tpu.vector_store %arg8[%c0_33, %c0_34, %c0_35], %48 {strides = array<i32>} : memref<1x2x128xf32, #tpu.memory_space<vmem>>, vector<1x2x128xf32>,
    } else {
    }
    %c0 = arith.constant 0 : index
    %c0_1 = arith.constant 0 : index
    %3 = vector.load %arg3[%c0, %c0_1] : memref<2x8xf32, #tpu.memory_space<vmem>>, vector<2x8xf32>
    %c0_2 = arith.constant 0 : index
    %c0_3 = arith.constant 0 : index
    %4 = vector.load %arg4[%c0_2, %c0_3] : memref<2x8xf32, #tpu.memory_space<vmem>>, vector<2x8xf32>
    %c0_4 = arith.constant 0 : index
    %c0_5 = arith.constant 0 : index
    %5 = vector.load %arg5[%c0_4, %c0_5] : memref<2x8xf32, #tpu.memory_space<vmem>>, vector<2x8xf32>
    %6 = arith.subf %3, %4 : vector<2x8xf32>
    %7 = math.exp %6 : vector<2x8xf32>
    %8 = arith.mulf %7, %5 : vector<2x8xf32>
    %cst = arith.constant 8.000000e-01 : f32
    %cst_6 = arith.constant 1.260000e+00 : f32
    %9 = vector.broadcast %cst : f32 to vector<2x8xf32>
    %10 = arith.maximumf %9, %7 : vector<2x8xf32>
    %11 = vector.broadcast %cst_6 : f32 to vector<2x8xf32>
    %12 = arith.minimumf %11, %10 : vector<2x8xf32>
    %13 = arith.mulf %12, %5 : vector<2x8xf32>
    %14 = arith.minimumf %8, %13 : vector<2x8xf32>
    %cst_7 = arith.constant 0.000000e+00 : f32
    %15 = vector.broadcast %cst_7 : f32 to vector<2x8xf32>
    %16 = arith.subf %15, %14 : vector<2x8xf32>
    %c0_8 = arith.constant 0 : index
    %c0_9 = arith.constant 0 : index
    %17 = vector.load %arg6[%c0_8, %c0_9] : memref<2x8xi8, #tpu.memory_space<vmem>>, vector<2x8xi8>
    %18 = arith.sitofp %17 : vector<2x8xi8> to vector<2x8xf32>
    %19 = arith.mulf %16, %18 : vector<2x8xf32>
    %c0_10 = arith.constant 0 : index
    %c0_11 = arith.constant 0 : index
    %c0_12 = arith.constant 0 : index
    %20 = vector.load %arg7[%c0_10, %c0_11, %c0_12] : memref<1x2x128xf32, #tpu.memory_space<vmem>>, vector<1x2x128xf32>
    %cst_13 = arith.constant dense<0.000000e+00> : vector<2xf32>
    %21 = vector.multi_reduction <add>, %19, %cst_13 [1] : vector<2x8xf32> to vector<2xf32>
    %22 = vector.shape_cast %21 : vector<2xf32> to vector<2x1xf32>
    %23 = tpu.iota {dimensions = array<i32: 1>} : vector<2x128xi32>
    %c0_i32_14 = arith.constant 0 : i32
    %24 = vector.broadcast %c0_i32_14 : i32 to vector<2x128xi32>
    %25 = arith.cmpi eq, %23, %24 : vector<2x128xi32>
    %cst_15 = arith.constant 0.000000e+00 : f32
    %26 = vector.shape_cast %22 : vector<2x1xf32> to vector<2x1xf32>
    %27 = vector.broadcast %26 : vector<2x1xf32> to vector<2x128xf32>
    %28 = vector.broadcast %cst_15 : f32 to vector<2x128xf32>
    %29 = arith.select %25, %27, %28 : vector<2x128xi1>, vector<2x128xf32>
    %30 = vector.shape_cast %29 : vector<2x128xf32> to vector<1x2x128xf32>
    %31 = arith.addf %20, %30 : vector<1x2x128xf32>
    %c0_16 = arith.constant 0 : index
    %c0_17 = arith.constant 0 : index
    %c0_18 = arith.constant 0 : index
    %32 = vector.load %arg7[%c0_16, %c0_17, %c0_18] : memref<1x2x128xf32, #tpu.memory_space<vmem>>, vector<1x2x128xf32>
    tpu.vector_store %arg7[%c0_16, %c0_17, %c0_18], %31 {strides = array<i32>} : memref<1x2x128xf32, #tpu.memory_space<vmem>>, vector<1x2x128xf32>,
    %c0_19 = arith.constant 0 : index
    %c0_20 = arith.constant 0 : index
    %c0_21 = arith.constant 0 : index
    %33 = vector.load %arg8[%c0_19, %c0_20, %c0_21] : memref<1x2x128xf32, #tpu.memory_space<vmem>>, vector<1x2x128xf32>
    %cst_22 = arith.constant dense<0.000000e+00> : vector<2xf32>
    %34 = vector.multi_reduction <add>, %18, %cst_22 [1] : vector<2x8xf32> to vector<2xf32>
    %35 = vector.shape_cast %34 : vector<2xf32> to vector<2x1xf32>
    %36 = tpu.iota {dimensions = array<i32: 1>} : vector<2x128xi32>
    %c0_i32_23 = arith.constant 0 : i32
    %37 = vector.broadcast %c0_i32_23 : i32 to vector<2x128xi32>
    %38 = arith.cmpi eq, %36, %37 : vector<2x128xi32>
    %cst_24 = arith.constant 0.000000e+00 : f32
    %39 = vector.shape_cast %35 : vector<2x1xf32> to vector<2x1xf32>
    %40 = vector.broadcast %39 : vector<2x1xf32> to vector<2x128xf32>
    %41 = vector.broadcast %cst_24 : f32 to vector<2x128xf32>
    %42 = arith.select %38, %40, %41 : vector<2x128xi1>, vector<2x128xf32>
    %43 = vector.shape_cast %42 : vector<2x128xf32> to vector<1x2x128xf32>
    %44 = arith.addf %33, %43 : vector<1x2x128xf32>
    %c0_25 = arith.constant 0 : index
    %c0_26 = arith.constant 0 : index
    %c0_27 = arith.constant 0 : index
    %45 = vector.load %arg8[%c0_25, %c0_26, %c0_27] : memref<1x2x128xf32, #tpu.memory_space<vmem>>, vector<1x2x128xf32>
    tpu.vector_store %arg8[%c0_25, %c0_26, %c0_27], %44 {strides = array<i32>} : memref<1x2x128xf32, #tpu.memory_space<vmem>>, vector<1x2x128xf32>,
    return
  }
  func.func @transform_0(%arg0: i32, %arg1: i32, %arg2: i32) -> (i32, i32) {
    %c1_i32 = arith.constant 1 : i32
    %0 = arith.muli %arg0, %c1_i32 : i32
    %1 = arith.addi %0, %arg2 : i32
    %c0_i32 = arith.constant 0 : i32
    %2 = arith.minsi %1, %c0_i32 : i32
    %c0_i32_0 = arith.constant 0 : i32
    return %arg1, %2 : i32, i32
  }
  func.func @transform_1(%arg0: i32, %arg1: i32, %arg2: i32) -> (i32, i32) {
    %c1_i32 = arith.constant 1 : i32
    %0 = arith.muli %arg0, %c1_i32 : i32
    %1 = arith.addi %0, %arg2 : i32
    %c0_i32 = arith.constant 0 : i32
    %2 = arith.minsi %1, %c0_i32 : i32
    %c0_i32_0 = arith.constant 0 : i32
    return %arg1, %2 : i32, i32
  }
  func.func @transform_2(%arg0: i32, %arg1: i32, %arg2: i32) -> (i32, i32) {
    %c1_i32 = arith.constant 1 : i32
    %0 = arith.muli %arg0, %c1_i32 : i32
    %1 = arith.addi %0, %arg2 : i32
    %c0_i32 = arith.constant 0 : i32
    %2 = arith.minsi %1, %c0_i32 : i32
    %c0_i32_0 = arith.constant 0 : i32
    return %arg1, %2 : i32, i32
  }
  func.func @transform_3(%arg0: i32, %arg1: i32, %arg2: i32) -> (i32, i32) {
    %c1_i32 = arith.constant 1 : i32
    %0 = arith.muli %arg0, %c1_i32 : i32
    %1 = arith.addi %0, %arg2 : i32
    %c0_i32 = arith.constant 0 : i32
    %2 = arith.minsi %1, %c0_i32 : i32
    %c0_i32_0 = arith.constant 0 : i32
    return %arg1, %2 : i32, i32
  }
  func.func @transform_4(%arg0: i32, %arg1: i32, %arg2: i32) -> (i32, i32, i32) {
    %c0_i32 = arith.constant 0 : i32
    %c0_i32_0 = arith.constant 0 : i32
    return %arg0, %arg1, %c0_i32 : i32, i32, i32
  }
  func.func @transform_5(%arg0: i32, %arg1: i32, %arg2: i32) -> (i32, i32, i32) {
    %c0_i32 = arith.constant 0 : i32
    %c0_i32_0 = arith.constant 0 : i32
    return %arg0, %arg1, %c0_i32 : i32, i32, i32
  }
}

</mosaic_0001>

<llo_original>
// kernel: tpu_custom_call.1
$region0: #{tpu_custom_call.1}
  #allocation0 [shape = 'u32[]', space=smem, size = 0x4, offset = 0x4, fixed_abs, tag = 'smem constant byte address 0x4 - core index']
  #allocation1 [shape = 'u32[144,128]{1,0:T(1,128)}', space=vmem, size = 0x12000, scoped, tag = 'internal scratch']
  %s0 = inlined_call_operand.hbm [shape: f32[2,8], index: 0, kind: input, shape index: {}]
  %s1 = inlined_call_operand.vmem [shape: f32[2,8], index: 1, kind: input, shape index: {}]
  %s2 = inlined_call_operand.vmem [shape: f32[2,8], index: 2, kind: input, shape index: {}]
  %s3 = inlined_call_operand.vmem [shape: s8[2,8], index: 3, kind: input, shape index: {}]
  %s4 = inlined_call_operand.hbm [shape: f32[1,2,128], index: 4, kind: output, shape index: {0}]
  %s5 = inlined_call_operand.hbm [shape: f32[1,2,128], index: 5, kind: output, shape index: {1}]
  %6 = xla_tuple %s4, %s5
  %s7 = sld [smem:[#allocation0]]
  $region42: #{tpu_custom_call.1} parent=0
    _
  %s9 = ssub.s32 1, %s7
  %s10 = scalar_select 0, %s9, %s7
  $region1: #{tpu_custom_call.1} parent=0
    #allocation2 [shape = 'u8[1024]{0}', space=vmem, size = 0x400, scoped, tag = 'input window, operand 0, single buffered']
    #allocation3 [shape = 's32[1]{0}', space=sflag, size = 0x4, scoped, tag = 'scoped memory for tpu_custom_call.1']
    #allocation4 [shape = 's32[1]{0}', space=sflag, size = 0x4, scoped, tag = 'scoped memory for tpu_custom_call.1']
    #allocation5 [shape = 'u8[1024]{0}', space=vmem, size = 0x400, scoped, tag = 'output window, operand 0, single buffered']
    #allocation6 [shape = 'u8[1024]{0}', space=vmem, size = 0x400, scoped, tag = 'output window, operand 1, single buffered']
    #allocation7 [shape = 's32[1]{0}', space=sflag, size = 0x4, scoped, tag = 'scoped memory for tpu_custom_call.1']
    %11 = vsyncpa [#allocation3], 0
    %12 = vsyncpa [#allocation4], 0
    %13 = vsyncpa [#allocation7], 0
    // Predicated region
    $region2: #{tpu_custom_call.1} parent=1 // pred_check
      _
    $region3: #{tpu_custom_call.1} parent=1 // pred_check_branch
      %15 = sbr.rel (0) target = $region5
    $region4: #{tpu_custom_call.1} parent=1 // pred_region
      %s16 = sadd.s32 0, 0
      %p17 = scmp.lt.s32.totalorder %s16, 0
      %s18 = scalar_select %p17, %s16, 0
      %s20 = ssub.s32 32, 32
      %21 = vsyncadd [#allocation3], %s20
      %s22 = smul.addr %s18, 32
      %s23 = scalar_lea.hbm %s0, %s22
      %s25 = sshll.u32 [#allocation2], 4
      %s26 = int_to_ptr.vmem [resolvable:$true] %s25
      %28 = dma.hbm_to_vmem [thread:$0]  %s23, 32, %s26, [#allocation3]
    $region5: #{tpu_custom_call.1} parent=1 // pred_fallthru
      _
    // Predicated region
    $region6: #{tpu_custom_call.1} parent=1 // pred_check
      _
    $region7: #{tpu_custom_call.1} parent=1 // pred_check_branch
      %30 = sbr.rel (0) target = $region9
    $region8: #{tpu_custom_call.1} parent=1 // pred_region
      %s31 = sadd.s32 0, 0
      %p32 = scmp.lt.s32.totalorder %s31, 0
      %s33 = scalar_select %p32, %s31, 0
      %p34 = scmp.lt.s32.totalorder %s33, 0
      %s35 = scalar_select %p34, %s33, 0
      %s36 = smul.addr %s35, 2
      %s37 = scalar_lea.vmem %s1, %s36
      %s38 = sadd.s32 0, 0
      %p39 = scmp.lt.s32.totalorder %s38, 0
      %s40 = scalar_select %p39, %s38, 0
    $region9: #{tpu_custom_call.1} parent=1 // pred_fallthru
      _
    // Predicated region
    $region10: #{tpu_custom_call.1} parent=1 // pred_check
      _
    $region11: #{tpu_custom_call.1} parent=1 // pred_check_branch
      %42 = sbr.rel (0) target = $region13
    $region12: #{tpu_custom_call.1} parent=1 // pred_region
      %s43 = sadd.s32 0, 0
      %p44 = scmp.lt.s32.totalorder %s43, 0
      %s45 = scalar_select %p44, %s43, 0
      %p46 = scmp.lt.s32.totalorder %s45, 0
      %s47 = scalar_select %p46, %s45, 0
      %s48 = smul.addr %s47, 2
      %s49 = scalar_lea.vmem %s2, %s48
      %s50 = sadd.s32 0, 0
      %p51 = scmp.lt.s32.totalorder %s50, 0
      %s52 = scalar_select %p51, %s50, 0
    $region13: #{tpu_custom_call.1} parent=1 // pred_fallthru
      _
    // Predicated region
    $region14: #{tpu_custom_call.1} parent=1 // pred_check
      _
    $region15: #{tpu_custom_call.1} parent=1 // pred_check_branch
      %54 = sbr.rel (0) target = $region17
    $region16: #{tpu_custom_call.1} parent=1 // pred_region
      %s55 = sadd.s32 0, 0
      %p56 = scmp.lt.s32.totalorder %s55, 0
      %s57 = scalar_select %p56, %s55, 0
      %p58 = scmp.lt.s32.totalorder %s57, 0
      %s59 = scalar_select %p58, %s57, 0
      %s60 = scalar_lea.vmem %s3, %s59
      %s61 = sadd.s32 0, 0
      %p62 = scmp.lt.s32.totalorder %s61, 0
      %s63 = scalar_select %p62, %s61, 0
    $region17: #{tpu_custom_call.1} parent=1 // pred_fallthru
      _
    // Predicated region
    $region18: #{tpu_custom_call.1} parent=1 // pred_check
      _
    $region19: #{tpu_custom_call.1} parent=1 // pred_check_branch
      %65 = sbr.rel (0) target = $region21
    $region20: #{tpu_custom_call.1} parent=1 // pred_region
      %66 = dma.done [#allocation3], 32
    $region21: #{tpu_custom_call.1} parent=1 // pred_fallthru
      _
    %s67 = sadd.s32 0, 0
    %p68 = scmp.lt.s32.totalorder %s67, 0
    %s69 = scalar_select %p68, %s67, 0
    %p70 = scmp.lt.s32.totalorder %s69, 0
    %s71 = scalar_select %p70, %s69, 0
    %s72 = smul.addr %s71, 2
    %s73 = scalar_lea.vmem %s1, %s72
    %s74 = sadd.s32 0, 0
    %p75 = scmp.lt.s32.totalorder %s74, 0
    %s76 = scalar_select %p75, %s74, 0
    %p77 = scmp.lt.s32.totalorder %s76, 0
    %s78 = scalar_select %p77, %s76, 0
    %s79 = smul.addr %s78, 2
    %s80 = scalar_lea.vmem %s2, %s79
    %s81 = sadd.s32 0, 0
    %p82 = scmp.lt.s32.totalorder %s81, 0
    %s83 = scalar_select %p82, %s81, 0
    %p84 = scmp.lt.s32.totalorder %s83, 0
    %s85 = scalar_select %p84, %s83, 0
    %s86 = scalar_lea.vmem %s3, %s85
    %s87 = sadd.s32 0, 0
    %p88 = scmp.lt.s32.totalorder %s87, 0
    %s89 = scalar_select %p88, %s87, 0
    %s90 = sadd.s32 0, 0
    %p91 = scmp.lt.s32.totalorder %s90, 0
    %s92 = scalar_select %p91, %s90, 0
    %p93 = scmp.lt.s32.totalorder %s92, 0
    %s94 = scalar_select %p93, %s92, 0
    %s95 = smul.addr %s94, 2
    %s96 = scalar_lea.vmem %s1, %s95
    %s97 = sadd.s32 0, 0
    %p98 = scmp.lt.s32.totalorder %s97, 0
    %s99 = scalar_select %p98, %s97, 0
    %s100 = sadd.s32 0, 0
    %p101 = scmp.lt.s32.totalorder %s100, 0
    %s102 = scalar_select %p101, %s100, 0
    %p103 = scmp.lt.s32.totalorder %s102, 0
    %s104 = scalar_select %p103, %s102, 0
    %s105 = smul.addr %s104, 2
    %s106 = scalar_lea.vmem %s2, %s105
    %s107 = sadd.s32 0, 0
    %p108 = scmp.lt.s32.totalorder %s107, 0
    %s109 = scalar_select %p108, %s107, 0
    %s110 = sadd.s32 0, 0
    %p111 = scmp.lt.s32.totalorder %s110, 0
    %s112 = scalar_select %p111, %s110, 0
    %p113 = scmp.lt.s32.totalorder %s112, 0
    %s114 = scalar_select %p113, %s112, 0
    %s115 = scalar_lea.vmem %s3, %s114
    %s116 = sadd.s32 0, 0
    %p117 = scmp.lt.s32.totalorder %s116, 0
    %s118 = scalar_select %p117, %s116, 0
    %p119 = scmp.eq.s32.totalorder 0, 0
    // Predicated region
    $region22: #{tpu_custom_call.1} parent=1 // pred_check
      %p120 = pneg %p119
    $region23: #{tpu_custom_call.1} parent=1 // pred_check_branch
      %122 = sbr.rel (%p120) target = $region25
    $region24: #{tpu_custom_call.1} parent=1 // pred_region
      %123 = vst [vmem:[#allocation5] sm:$0x3] 0.0
      %124 = vst [vmem:[#allocation6] sm:$0x3] 0.0
    $region25: #{tpu_custom_call.1} parent=1 // pred_fallthru
      _
    %v125 = vld [vmem:[#allocation2] sm:$0x3]
    %v126 = vld [vmem:[%s96] sm:$0x3]
    %v127 = vld [vmem:[%s106] sm:$0x3]
    %v128 = vsub.f32 %v125, %v126
    %v129 = vmul.f32 %v128, 1.442695
    %v130 = vpow.pop %v129
    %v131 = vmul.f32 %v130, %v127
    %v132 = vmax.f32 %v130, 0.8
    %v133 = vmin.f32 %v132, 1.26
    %v134 = vmul.f32 %v133, %v127
    %v135 = vmin.f32 %v131, %v134
    %v136 = vsub.f32 0.0, %v135
    %v137 = vld [vmem:[%s115] sm:$0x1]
    %v138 = vunpack.c.0.s8 %v137
    %v139 = vcvt.s32.f32 %v138
    %v140 = vmul.f32 %v136, %v139
    %v141 = vld [vmem:[#allocation5] sm:$0x3]
    %vm142 = vcmask 58368
    %v143 = vsel %vm142, %v140, 0.0
    %144 = vadd.xlane.f32.xlu0 %v143
    %v145 = vpop.xlane.xlu0 %144
    %v146 = vlaneseq
    %v147 = vand.u32 %v146, 127
    %vm148 = vcmp.eq.s32.totalorder %v147, 0
    %v149 = vsel %vm148, %v145, 0.0
    %v150 = vadd.f32 %v141, %v149
    %151 = vst [vmem:[#allocation5] sm:$0x3] %v150
    %v152 = vld [vmem:[#allocation6] sm:$0x3]
    %v153 = vsel %vm142, %v139, 0.0
    %154 = vadd.xlane.f32.xlu0 %v153
    %v155 = vpop.xlane.xlu0 %154
    %v156 = vsel %vm148, %v155, 0.0
    %v157 = vadd.f32 %v152, %v156
    %158 = vst [vmem:[#allocation6] sm:$0x3] %v157
    // Predicated region
    $region26: #{tpu_custom_call.1} parent=1 // pred_check
      _
    $region27: #{tpu_custom_call.1} parent=1 // pred_check_branch
      %160 = sbr.rel (0) target = $region29
    $region28: #{tpu_custom_call.1} parent=1 // pred_region
      %s162 = ssub.s32 32, 32
      %163 = vsyncadd [#allocation4], %s162
      %s165 = sshll.u32 [#allocation5], 4
      %s166 = int_to_ptr.vmem [resolvable:$true] %s165
      %168 = dma.vmem_to_hbm [thread:$0]  %s166, 32, %s4, [#allocation4]
    $region29: #{tpu_custom_call.1} parent=1 // pred_fallthru
      _
    // Predicated region
    $region30: #{tpu_custom_call.1} parent=1 // pred_check
      _
    $region31: #{tpu_custom_call.1} parent=1 // pred_check_branch
      %170 = sbr.rel (0) target = $region33
    $region32: #{tpu_custom_call.1} parent=1 // pred_region
      %s172 = ssub.s32 32, 32
      %173 = vsyncadd [#allocation7], %s172
      %s175 = sshll.u32 [#allocation6], 4
      %s176 = int_to_ptr.vmem [resolvable:$true] %s175
      %178 = dma.vmem_to_hbm [thread:$0]  %s176, 32, %s5, [#allocation7]
    $region33: #{tpu_custom_call.1} parent=1 // pred_fallthru
      _
    // Predicated region
    $region34: #{tpu_custom_call.1} parent=1 // pred_check
      _
    $region35: #{tpu_custom_call.1} parent=1 // pred_check_branch
      %180 = sbr.rel (0) target = $region37
    $region36: #{tpu_custom_call.1} parent=1 // pred_region
      %181 = dma.done [#allocation4], 32
    $region37: #{tpu_custom_call.1} parent=1 // pred_fallthru
      _
    // Predicated region
    $region38: #{tpu_custom_call.1} parent=1 // pred_check
      _
    $region39: #{tpu_custom_call.1} parent=1 // pred_check_branch
      %183 = sbr.rel (0) target = $region41
    $region40: #{tpu_custom_call.1} parent=1 // pred_region
      %184 = dma.done [#allocation7], 32
    $region41: #{tpu_custom_call.1} parent=1 // pred_fallthru
      _
    %185 = vsyncpa [#allocation3], 1
    %186 = vsyncpa [#allocation4], 1
    %187 = vsyncpa [#allocation7], 1

</llo_original>
